<compile_context>
chip_gen: v7x
topology: tpu7x:2x2x1
jax: 0.10.0
libtpu: 0.0.40
codegen_flags: <defaults>
</compile_context>

<pallas_src>
import functools

import jax
import jax.numpy as jnp
from jax.experimental import pallas as pl
from jax.experimental.pallas import tpu as pltpu


def _round_up(x: int, m: int) -> int:
    return ((x + m - 1) // m) * m


# ---------------------------------------------------------------------------
# Kernel 1: projection  proj = features @ W        (cheap, row-tiled)
# ---------------------------------------------------------------------------
def _proj_kernel(feat_ref, w_ref, proj_ref):
    proj_ref[...] = jnp.dot(
        feat_ref[...], w_ref[...], preferred_element_type=jnp.float32
    ).astype(proj_ref.dtype)


# ---------------------------------------------------------------------------
# Kernel 2: aggregation  out = adj @ proj + bias   (tiled, accumulated)
# ---------------------------------------------------------------------------
def _agg_kernel(adj_ref, proj_ref, b_ref, out_ref, acc_ref):
    k = pl.program_id(2)

    @pl.when(k == 0)
    def _():
        acc_ref[...] = jnp.zeros_like(acc_ref)

    acc_ref[...] += jnp.dot(
        adj_ref[...], proj_ref[...], preferred_element_type=jnp.float32
    )

    @pl.when(k == pl.num_programs(2) - 1)
    def _():
        # Bias is a one-time epilogue add (broadcast over the tm rows).
        out_ref[...] = (acc_ref[...] + b_ref[...]).astype(out_ref.dtype)


# ---------------------------------------------------------------------------
# Wrapper
# ---------------------------------------------------------------------------
@functools.partial(jax.jit, static_argnames=())
def graph_convolution(adj, features, weight, bias):
    """adj: (N,N), features: (N,F_in), weight: (F_in,F_out), bias: (F_out,)."""
    N = adj.shape[0]
    F_in = features.shape[1]
    F_out = weight.shape[1]

    # Pad everything to lane/sublane-friendly multiples of 128.
    N_pad = _round_up(max(N, 1), 128)
    F_in_pad = _round_up(max(F_in, 1), 128)
    F_out_pad = _round_up(max(F_out, 1), 128)

    # Tile sizes (safe across v5e/v6e/v7x; tiny VMEM footprint, 256-aligned
    # when the padded dims allow it).
    tm = 256 if N_pad % 256 == 0 else 128        # adj rows / out rows
    tk = 256 if N_pad % 256 == 0 else 128        # reduction over N
    tn = 256 if F_out_pad % 256 == 0 else 128    # output columns

    f32 = jnp.float32
    adj_p = jnp.pad(adj.astype(f32), ((0, N_pad - N), (0, N_pad - N)))
    feat_p = jnp.pad(features.astype(f32), ((0, N_pad - N), (0, F_in_pad - F_in)))
    w_p = jnp.pad(weight.astype(f32), ((0, F_in_pad - F_in), (0, F_out_pad - F_out)))
    b_p = jnp.pad(bias.astype(f32).reshape(1, F_out), ((0, 0), (0, F_out_pad - F_out)))

    # --- Pass 1: proj = features @ W  (padded rows of features are zero, so
    #     padded rows of proj are zero and contribute nothing to adj @ proj).
    proj = pl.pallas_call(
        _proj_kernel,
        out_shape=jax.ShapeDtypeStruct((N_pad, F_out_pad), f32),
        grid=(N_pad // tm,),
        in_specs=[
            pl.BlockSpec((tm, F_in_pad), lambda i: (i, 0)),
            pl.BlockSpec((F_in_pad, F_out_pad), lambda i: (0, 0)),
        ],
        out_specs=pl.BlockSpec((tm, F_out_pad), lambda i: (i, 0)),
        compiler_params=pltpu.CompilerParams(
            dimension_semantics=("parallel",)
        ),
    )(feat_p, w_p)

    # --- Pass 2: out = adj @ proj + bias  (tiled, f32 VMEM accumulator).
    out_p = pl.pallas_call(
        _agg_kernel,
        out_shape=jax.ShapeDtypeStruct((N_pad, F_out_pad), f32),
        grid=(N_pad // tm, F_out_pad // tn, N_pad // tk),
        in_specs=[
            pl.BlockSpec((tm, tk), lambda i, j, k: (i, k)),   # adj tile
            pl.BlockSpec((tk, tn), lambda i, j, k: (k, j)),   # proj tile
            pl.BlockSpec((1, tn), lambda i, j, k: (0, j)),    # bias tile
        ],
        out_specs=pl.BlockSpec((tm, tn), lambda i, j, k: (i, j)),
        scratch_shapes=[pltpu.VMEM((tm, tn), jnp.float32)],
        compiler_params=pltpu.CompilerParams(
            dimension_semantics=("parallel", "parallel", "arbitrary")
        ),
    )(adj_p, proj, b_p)

    return out_p[:N, :F_out]


if __name__ == "__main__":
    key = jax.random.PRNGKey(0)

    def run_case(N, F_in, F_out, key):
        k_adj, k_feat, k_w, k_b = jax.random.split(key, 4)
        adj = jax.random.uniform(k_adj, (N, N), dtype=jnp.float32)
        features = jax.random.normal(k_feat, (N, F_in), dtype=jnp.float32)
        bound = 1.0 / (F_in ** 0.5)
        weight = jax.random.uniform(k_w, (F_in, F_out), dtype=jnp.float32,
                                    minval=-bound, maxval=bound)
        bias = jax.random.uniform(k_b, (F_out,), dtype=jnp.float32,
                                  minval=-bound, maxval=bound)

        out = jax.block_until_ready(graph_convolution(adj, features, weight, bias))
        ref = (adj @ features) @ weight + bias
        assert out.shape == (N, F_out)
        assert jnp.allclose(out, ref, atol=1e-4, rtol=1e-4), (
            f"mismatch for N={N}, F_in={F_in}, F_out={F_out}: "
            f"max abs err {jnp.max(jnp.abs(out - ref))}"
        )

    # Small shape consistent with the module (single padded tile).
    run_case(N=8, F_in=32, F_out=16, key=jax.random.fold_in(key, 0))
    # Slightly larger non-aligned shape to exercise padding + multi-tile grid.
    run_case(N=300, F_in=96, F_out=20, key=jax.random.fold_in(key, 1))

    print("KERNEL_OK")
</pallas_src>

<mosaic_0001>
module attributes {stable_mosaic.version = 11 : i64} {
  func.func @_proj_kernel(%arg0: i32, %arg1: memref<128x128xf32, #tpu.memory_space<vmem>>, %arg2: memref<128x128xf32, #tpu.memory_space<vmem>>, %arg3: memref<128x128xf32, #tpu.memory_space<vmem>>) attributes {dimension_semantics = [#tpu.dimension_semantics<parallel>], iteration_bounds = array<i64: 1>, scalar_prefetch = 0 : i64, scratch_operands = 0 : i64, tpu.core_type = #tpu.core_type<tc>, window_params = [{transform_indices = @transform_0, window_bounds = array<i64: 128, 128>}, {pipeline_mode = #tpu.pipeline_mode<synchronous>, transform_indices = @transform_1, window_bounds = array<i64: 128, 128>}, {transform_indices = @transform_2, window_bounds = array<i64: 128, 128>}]} {
    %c0 = arith.constant 0 : index
    %c0_0 = arith.constant 0 : index
    %0 = vector.load %arg1[%c0, %c0_0] : memref<128x128xf32, #tpu.memory_space<vmem>>, vector<128x128xf32>
    %c0_1 = arith.constant 0 : index
    %c0_2 = arith.constant 0 : index
    %1 = vector.load %arg2[%c0_1, %c0_2] : memref<128x128xf32, #tpu.memory_space<vmem>>, vector<128x128xf32>
    %cst = arith.constant dense<0.000000e+00> : vector<128x128xf32>
    %2 = tpu.matmul %0, %1, %cst {dimension_numbers = #tpu.dot_dimension_numbers<[1], [0], [0], [1], [0, 0, 1, 1], [], []>} : vector<128x128xf32>, vector<128x128xf32>, vector<128x128xf32> -> vector<128x128xf32>
    %c0_3 = arith.constant 0 : index
    %c0_4 = arith.constant 0 : index
    %3 = vector.load %arg3[%c0_3, %c0_4] : memref<128x128xf32, #tpu.memory_space<vmem>>, vector<128x128xf32>
    tpu.vector_store %arg3[%c0_3, %c0_4], %2 {strides = array<i32>} : memref<128x128xf32, #tpu.memory_space<vmem>>, vector<128x128xf32>,
    return
  }
  func.func @transform_0(%arg0: i32) -> (i32, i32) {
    %c0_i32 = arith.constant 0 : i32
    %c0_i32_0 = arith.constant 0 : i32
    return %arg0, %c0_i32 : i32, i32
  }
  func.func @transform_1(%arg0: i32) -> (i32, i32) {
    %c0_i32 = arith.constant 0 : i32
    %c0_i32_0 = arith.constant 0 : i32
    %c0_i32_1 = arith.constant 0 : i32
    return %c0_i32, %c0_i32_0 : i32, i32
  }
  func.func @transform_2(%arg0: i32) -> (i32, i32) {
    %c0_i32 = arith.constant 0 : i32
    %c0_i32_0 = arith.constant 0 : i32
    return %arg0, %c0_i32 : i32, i32
  }
}

module attributes {stable_mosaic.version = 11 : i64} {
  func.func @_agg_kernel(%arg0: i32, %arg1: i32, %arg2: i32, %arg3: memref<128x128xf32, #tpu.memory_space<vmem>>, %arg4: memref<128x128xf32, #tpu.memory_space<vmem>>, %arg5: memref<1x128xf32, #tpu.memory_space<vmem>>, %arg6: memref<128x128xf32, #tpu.memory_space<vmem>>, %arg7: memref<128x128xf32, #tpu.memory_space<vmem>>) attributes {dimension_semantics = [#tpu.dimension_semantics<parallel>, #tpu.dimension_semantics<parallel>, #tpu.dimension_semantics<arbitrary>], iteration_bounds = array<i64: 1, 1, 1>, scalar_prefetch = 0 : i64, scratch_operands = 1 : i64, tpu.core_type = #tpu.core_type<tc>, window_params = [{transform_indices = @transform_0, window_bounds = array<i64: 128, 128>}, {transform_indices = @transform_1, window_bounds = array<i64: 128, 128>}, {transform_indices = @transform_2, window_bounds = array<i64: 1, 128>}, {transform_indices = @transform_3, window_bounds = array<i64: 128, 128>}]} {
    %c0_i32 = arith.constant 0 : i32
    %0 = arith.cmpi eq, %arg2, %c0_i32 : i32
    %1 = arith.extui %0 : i1 to i32
    %c0_i32_0 = arith.constant 0 : i32
    %2 = arith.cmpi ne, %1, %c0_i32_0 : i32
    scf.if %2 {
      %cst_10 = arith.constant 0.000000e+00 : f32
      %12 = vector.broadcast %cst_10 : f32 to vector<128x128xf32>
      %c0_11 = arith.constant 0 : index
      %c0_12 = arith.constant 0 : index
      %13 = vector.load %arg7[%c0_11, %c0_12] : memref<128x128xf32, #tpu.memory_space<vmem>>, vector<128x128xf32>
      tpu.vector_store %arg7[%c0_11, %c0_12], %12 {strides = array<i32>} : memref<128x128xf32, #tpu.memory_space<vmem>>, vector<128x128xf32>,
    } else {
    }
    %c0 = arith.constant 0 : index
    %c0_1 = arith.constant 0 : index
    %3 = vector.load %arg7[%c0, %c0_1] : memref<128x128xf32, #tpu.memory_space<vmem>>, vector<128x128xf32>
    %c0_2 = arith.constant 0 : index
    %c0_3 = arith.constant 0 : index
    %4 = vector.load %arg3[%c0_2, %c0_3] : memref<128x128xf32, #tpu.memory_space<vmem>>, vector<128x128xf32>
    %c0_4 = arith.constant 0 : index
    %c0_5 = arith.constant 0 : index
    %5 = vector.load %arg4[%c0_4, %c0_5] : memref<128x128xf32, #tpu.memory_space<vmem>>, vector<128x128xf32>
    %cst = arith.constant dense<0.000000e+00> : vector<128x128xf32>
    %6 = tpu.matmul %4, %5, %cst {dimension_numbers = #tpu.dot_dimension_numbers<[1], [0], [0], [1], [0, 0, 1, 1], [], []>} : vector<128x128xf32>, vector<128x128xf32>, vector<128x128xf32> -> vector<128x128xf32>
    %7 = arith.addf %3, %6 : vector<128x128xf32>
    %c0_6 = arith.constant 0 : index
    %c0_7 = arith.constant 0 : index
    %8 = vector.load %arg7[%c0_6, %c0_7] : memref<128x128xf32, #tpu.memory_space<vmem>>, vector<128x128xf32>
    tpu.vector_store %arg7[%c0_6, %c0_7], %7 {strides = array<i32>} : memref<128x128xf32, #tpu.memory_space<vmem>>, vector<128x128xf32>,
    %c0_i32_8 = arith.constant 0 : i32
    %9 = arith.cmpi eq, %arg2, %c0_i32_8 : i32
    %10 = arith.extui %9 : i1 to i32
    %c0_i32_9 = arith.constant 0 : i32
    %11 = arith.cmpi ne, %10, %c0_i32_9 : i32
    scf.if %11 {
      %c0_10 = arith.constant 0 : index
      %c0_11 = arith.constant 0 : index
      %12 = vector.load %arg7[%c0_10, %c0_11] : memref<128x128xf32, #tpu.memory_space<vmem>>, vector<128x128xf32>
      %c0_12 = arith.constant 0 : index
      %c0_13 = arith.constant 0 : index
      %13 = vector.load %arg5[%c0_12, %c0_13] : memref<1x128xf32, #tpu.memory_space<vmem>>, vector<1x128xf32>
      %14 = vector.broadcast %13 : vector<1x128xf32> to vector<128x128xf32>
      %15 = arith.addf %12, %14 : vector<128x128xf32>
      %c0_14 = arith.constant 0 : index
      %c0_15 = arith.constant 0 : index
      %16 = vector.load %arg6[%c0_14, %c0_15] : memref<128x128xf32, #tpu.memory_space<vmem>>, vector<128x128xf32>
      tpu.vector_store %arg6[%c0_14, %c0_15], %15 {strides = array<i32>} : memref<128x128xf32, #tpu.memory_space<vmem>>, vector<128x128xf32>,
    } else {
    }
    return
  }
  func.func @transform_0(%arg0: i32, %arg1: i32, %arg2: i32) -> (i32, i32) {
    %c0_i32 = arith.constant 0 : i32
    return %arg0, %arg2 : i32, i32
  }
  func.func @transform_1(%arg0: i32, %arg1: i32, %arg2: i32) -> (i32, i32) {
    %c0_i32 = arith.constant 0 : i32
    return %arg2, %arg1 : i32, i32
  }
  func.func @transform_2(%arg0: i32, %arg1: i32, %arg2: i32) -> (i32, i32) {
    %c0_i32 = arith.constant 0 : i32
    %c0_i32_0 = arith.constant 0 : i32
    return %c0_i32, %arg1 : i32, i32
  }
  func.func @transform_3(%arg0: i32, %arg1: i32, %arg2: i32) -> (i32, i32) {
    %c0_i32 = arith.constant 0 : i32
    return %arg0, %arg1 : i32, i32
  }
}

</mosaic_0001>

<llo_original>
// kernel: graph_convolution.2
$region0: #{graph_convolution.2}
  #allocation0 [shape = 'u32[]', space=smem, size = 0x4, offset = 0x4, fixed_abs, tag = 'smem constant byte address 0x4 - core index']
  #allocation1 [shape = 'u32[144,128]{1,0:T(1,128)}', space=vmem, size = 0x12000, scoped, tag = 'internal scratch']
  %s0 = inlined_call_operand.vmem [shape: f32[128,128], index: 0, kind: input, shape index: {}]
  %s1 = inlined_call_operand.vmem [shape: f32[128,128], index: 1, kind: input, shape index: {}]
  %s2 = inlined_call_operand.vmem [shape: f32[128,128], index: 2, kind: output, shape index: {}]
  %s3 = sld [smem:[#allocation0]]
  $region18: #{graph_convolution.2} parent=0
    _
  %s5 = ssub.s32 1, %s3
  %s6 = scalar_select 0, %s5, %s3
  // Predicated region
  $region2: #{graph_convolution.2} parent=0 // pred_check
    _
  $region3: #{graph_convolution.2} parent=0 // pred_check_branch
    %8 = sbr.rel (0) target = $region5
  $region4: #{graph_convolution.2} parent=0 // pred_region
    _
  $region5: #{graph_convolution.2} parent=0 // pred_fallthru
    _
  // Predicated region
  $region6: #{graph_convolution.2} parent=0 // pred_check
    _
  $region7: #{graph_convolution.2} parent=0 // pred_check_branch
    %10 = sbr.rel (0) target = $region9
  $region8: #{graph_convolution.2} parent=0 // pred_region
    _
  $region9: #{graph_convolution.2} parent=0 // pred_fallthru
    _
  %v11 = vld [vmem:[%s0] sm:$0xff]
  %v12 = vld [vmem:[%s0 + $0x8] sm:$0xff]
  %v13 = vld [vmem:[%s0 + $0x10] sm:$0xff]
  %v14 = vld [vmem:[%s0 + $0x18] sm:$0xff]
  %v15 = vld [vmem:[%s0 + $0x20] sm:$0xff]
  %v16 = vld [vmem:[%s0 + $0x28] sm:$0xff]
  %v17 = vld [vmem:[%s0 + $0x30] sm:$0xff]
  %v18 = vld [vmem:[%s0 + $0x38] sm:$0xff]
  %v19 = vld [vmem:[%s0 + $0x40] sm:$0xff]
  %v20 = vld [vmem:[%s0 + $0x48] sm:$0xff]
  %v21 = vld [vmem:[%s0 + $0x50] sm:$0xff]
  %v22 = vld [vmem:[%s0 + $0x58] sm:$0xff]
  %v23 = vld [vmem:[%s0 + $0x60] sm:$0xff]
  %v24 = vld [vmem:[%s0 + $0x68] sm:$0xff]
  %v25 = vld [vmem:[%s0 + $0x70] sm:$0xff]
  %v26 = vld [vmem:[%s0 + $0x78] sm:$0xff]
  %v27 = vld [vmem:[%s1] sm:$0xff]
  %v28 = vld [vmem:[%s1 + $0x8] sm:$0xff]
  %v29 = vld [vmem:[%s1 + $0x10] sm:$0xff]
  %v30 = vld [vmem:[%s1 + $0x18] sm:$0xff]
  %v31 = vld [vmem:[%s1 + $0x20] sm:$0xff]
  %v32 = vld [vmem:[%s1 + $0x28] sm:$0xff]
  %v33 = vld [vmem:[%s1 + $0x30] sm:$0xff]
  %v34 = vld [vmem:[%s1 + $0x38] sm:$0xff]
  %v35 = vld [vmem:[%s1 + $0x40] sm:$0xff]
  %v36 = vld [vmem:[%s1 + $0x48] sm:$0xff]
  %v37 = vld [vmem:[%s1 + $0x50] sm:$0xff]
  %v38 = vld [vmem:[%s1 + $0x58] sm:$0xff]
  %v39 = vld [vmem:[%s1 + $0x60] sm:$0xff]
  %v40 = vld [vmem:[%s1 + $0x68] sm:$0xff]
  %v41 = vld [vmem:[%s1 + $0x70] sm:$0xff]
  %v42 = vld [vmem:[%s1 + $0x78] sm:$0xff]
  %43 = vmatprep.subr.mxu0 0.0
  %44 = vmatpush1.msra.mxu0 %v27
  %45 = vmatprep.subr.mxu0 0.0
  %46 = vmatpush1.msra.mxu0 %v28
  %47 = vmatprep.subr.mxu0 0.0
  %48 = vmatpush1.msra.mxu0 %v29
  %49 = vmatprep.subr.mxu0 0.0
  %50 = vmatpush1.msra.mxu0 %v30
  %51 = vmatprep.subr.mxu0 0.0
  %52 = vmatpush1.msra.mxu0 %v31
  %53 = vmatprep.subr.mxu0 0.0
  %54 = vmatpush1.msra.mxu0 %v32
  %55 = vmatprep.subr.mxu0 0.0
  %56 = vmatpush1.msra.mxu0 %v33
  %57 = vmatprep.subr.mxu0 0.0
  %58 = vmatpush1.msra.mxu0 %v34
  %59 = vmatprep.subr.mxu0 0.0
  %60 = vmatpush1.msra.mxu0 %v35
  %61 = vmatprep.subr.mxu0 0.0
  %62 = vmatpush1.msra.mxu0 %v36
  %63 = vmatprep.subr.mxu0 0.0
  %64 = vmatpush1.msra.mxu0 %v37
  %65 = vmatprep.subr.mxu0 0.0
  %66 = vmatpush1.msra.mxu0 %v38
  %67 = vmatprep.subr.mxu0 0.0
  %68 = vmatpush1.msra.mxu0 %v39
  %69 = vmatprep.subr.mxu0 0.0
  %70 = vmatpush1.msra.mxu0 %v40
  %71 = vmatprep.subr.mxu0 0.0
  %72 = vmatpush1.msra.mxu0 %v41
  %73 = vmatprep.subr.mxu0 0.0
  %74 = vmatpush1.msra.mxu0 %v42
  %75 = vmatprep.subr.mxu0 0.0
  %76 = vmatpush1.msra.mxu0 0.0
  %77 = vmatprep.subr.mxu0 0.0
  %78 = vmatpush1.msra.mxu0 0.0
  %79 = vmatprep.subr.mxu0 0.0
  %80 = vmatpush1.msra.mxu0 0.0
  %81 = vmatprep.subr.mxu0 0.0
  %82 = vmatpush1.msra.mxu0 0.0
  %83 = vmatprep.subr.mxu0 0.0
  %84 = vmatpush1.msra.mxu0 0.0
  %85 = vmatprep.subr.mxu0 0.0
  %86 = vmatpush1.msra.mxu0 0.0
  %87 = vmatprep.subr.mxu0 0.0
  %88 = vmatpush1.msra.mxu0 0.0
  %89 = vmatprep.subr.mxu0 0.0
  %90 = vmatpush1.msra.mxu0 0.0
  %91 = vmatprep.subr.mxu0 0.0
  %92 = vmatpush1.msra.mxu0 0.0
  %93 = vmatprep.subr.mxu0 0.0
  %94 = vmatpush1.msra.mxu0 0.0
  %95 = vmatprep.subr.mxu0 0.0
  %96 = vmatpush1.msra.mxu0 0.0
  %97 = vmatprep.subr.mxu0 0.0
  %98 = vmatpush1.msra.mxu0 0.0
  %99 = vmatprep.subr.mxu0 0.0
  %100 = vmatpush1.msra.mxu0 0.0
  %101 = vmatprep.subr.mxu0 0.0
  %102 = vmatpush1.msra.mxu0 0.0
  %103 = vmatprep.subr.mxu0 0.0
  %104 = vmatpush1.msra.mxu0 0.0
  %105 = vmatprep.subr.mxu0 0.0
  %106 = vmatpush1.msra.mxu0 0.0
  %107 = vmatprep.mubr.f32.mxu0 0.0
  %108 = vmatmul.mubr.f32.gmra.mrb[0].mxu0 %v11
  %v109 = vpop.f32.mrb[0].mxu0
  %v110 = vadd.f32 0.0, %v109
  %v111 = vpop.f32.mrb[0].mxu0
  %112 = vmatprep.mubr.f32.mxu0 0.0
  %113 = vmatmul.mubr.f32.gmra.mrb[0].mxu0 %v12
  %v114 = vpop.f32.mrb[0].mxu0
  %v115 = vadd.f32 0.0, %v114
  %v116 = vpop.f32.mrb[0].mxu0
  %117 = vmatprep.mubr.f32.mxu0 0.0
  %118 = vmatmul.mubr.f32.gmra.mrb[0].mxu0 %v13
  %v119 = vpop.f32.mrb[0].mxu0
  %v120 = vadd.f32 0.0, %v119
  %v121 = vpop.f32.mrb[0].mxu0
  %122 = vmatprep.mubr.f32.mxu0 0.0
  %123 = vmatmul.mubr.f32.gmra.mrb[0].mxu0 %v14
  %v124 = vpop.f32.mrb[0].mxu0
  %v125 = vadd.f32 0.0, %v124
  %v126 = vpop.f32.mrb[0].mxu0
  %127 = vmatprep.mubr.f32.mxu0 0.0
  %128 = vmatmul.mubr.f32.gmra.mrb[0].mxu0 %v15
  %v129 = vpop.f32.mrb[0].mxu0
  %v130 = vadd.f32 0.0, %v129
  %v131 = vpop.f32.mrb[0].mxu0
  %132 = vmatprep.mubr.f32.mxu0 0.0
  %133 = vmatmul.mubr.f32.gmra.mrb[0].mxu0 %v16
  %v134 = vpop.f32.mrb[0].mxu0
  %v135 = vadd.f32 0.0, %v134
  %v136 = vpop.f32.mrb[0].mxu0
  %137 = vmatprep.mubr.f32.mxu0 0.0
  %138 = vmatmul.mubr.f32.gmra.mrb[0].mxu0 %v17
  %v139 = vpop.f32.mrb[0].mxu0
  %v140 = vadd.f32 0.0, %v139
  %v141 = vpop.f32.mrb[0].mxu0
  %142 = vmatprep.mubr.f32.mxu0 0.0
  %143 = vmatmul.mubr.f32.gmra.mrb[0].mxu0 %v18
  %v144 = vpop.f32.mrb[0].mxu0
  %v145 = vadd.f32 0.0, %v144
  %v146 = vpop.f32.mrb[0].mxu0
  %147 = vmatprep.mubr.f32.mxu0 0.0
  %148 = vmatmul.mubr.f32.gmra.mrb[0].mxu0 %v19
  %v149 = vpop.f32.mrb[0].mxu0
  %v150 = vadd.f32 0.0, %v149
  %v151 = vpop.f32.mrb[0].mxu0
  %152 = vmatprep.mubr.f32.mxu0 0.0
  %153 = vmatmul.mubr.f32.gmra.mrb[0].mxu0 %v20
  %v154 = vpop.f32.mrb[0].mxu0
  %v155 = vadd.f32 0.0, %v154
  %v156 = vpop.f32.mrb[0].mxu0
  %157 = vmatprep.mubr.f32.mxu0 0.0
  %158 = vmatmul.mubr.f32.gmra.mrb[0].mxu0 %v21
  %v159 = vpop.f32.mrb[0].mxu0
  %v160 = vadd.f32 0.0, %v159
  %v161 = vpop.f32.mrb[0].mxu0
  %162 = vmatprep.mubr.f32.mxu0 0.0
  %163 = vmatmul.mubr.f32.gmra.mrb[0].mxu0 %v22
  %v164 = vpop.f32.mrb[0].mxu0
  %v165 = vadd.f32 0.0, %v164
  %v166 = vpop.f32.mrb[0].mxu0
  %167 = vmatprep.mubr.f32.mxu0 0.0
  %168 = vmatmul.mubr.f32.gmra.mrb[0].mxu0 %v23
  %v169 = vpop.f32.mrb[0].mxu0
  %v170 = vadd.f32 0.0, %v169
  %v171 = vpop.f32.mrb[0].mxu0
  %172 = vmatprep.mubr.f32.mxu0 0.0
  %173 = vmatmul.mubr.f32.gmra.mrb[0].mxu0 %v24
  %v174 = vpop.f32.mrb[0].mxu0
  %v175 = vadd.f32 0.0, %v174
  %v176 = vpop.f32.mrb[0].mxu0
  %177 = vmatprep.mubr.f32.mxu0 0.0
  %178 = vmatmul.mubr.f32.gmra.mrb[0].mxu0 %v25
  %v179 = vpop.f32.mrb[0].mxu0
  %v180 = vadd.f32 0.0, %v179
  %v181 = vpop.f32.mrb[0].mxu0
  %182 = vmatprep.mubr.f32.mxu0 0.0
  %183 = vmatmul.mubr.f32.gmra.mrb[0].mxu0 %v26
  %v184 = vpop.f32.mrb[0].mxu0
  %v185 = vadd.f32 0.0, %v184
  %v186 = vpop.f32.mrb[0].mxu0
  %187 = vdwg.mxu0
  %188 = vst [vmem:[%s2] sm:$0xff] %v110
  %189 = vst [vmem:[%s2 + $0x8] sm:$0xff] %v115
  %190 = vst [vmem:[%s2 + $0x10] sm:$0xff] %v120
  %191 = vst [vmem:[%s2 + $0x18] sm:$0xff] %v125
  %192 = vst [vmem:[%s2 + $0x20] sm:$0xff] %v130
  %193 = vst [vmem:[%s2 + $0x28] sm:$0xff] %v135
  %194 = vst [vmem:[%s2 + $0x30] sm:$0xff] %v140
  %195 = vst [vmem:[%s2 + $0x38] sm:$0xff] %v145
  %196 = vst [vmem:[%s2 + $0x40] sm:$0xff] %v150
  %197 = vst [vmem:[%s2 + $0x48] sm:$0xff] %v155
  %198 = vst [vmem:[%s2 + $0x50] sm:$0xff] %v160
  %199 = vst [vmem:[%s2 + $0x58] sm:$0xff] %v165
  %200 = vst [vmem:[%s2 + $0x60] sm:$0xff] %v170
  %201 = vst [vmem:[%s2 + $0x68] sm:$0xff] %v175
  %202 = vst [vmem:[%s2 + $0x70] sm:$0xff] %v180
  %203 = vst [vmem:[%s2 + $0x78] sm:$0xff] %v185
  // Predicated region
  $region10: #{graph_convolution.2} parent=0 // pred_check
    _
  $region11: #{graph_convolution.2} parent=0 // pred_check_branch
    %205 = sbr.rel (0) target = $region13
  $region12: #{graph_convolution.2} parent=0 // pred_region
    _
  $region13: #{graph_convolution.2} parent=0 // pred_fallthru
    _
  // Predicated region
  $region14: #{graph_convolution.2} parent=0 // pred_check
    _
  $region15: #{graph_convolution.2} parent=0 // pred_check_branch
    %207 = sbr.rel (0) target = $region17
  $region16: #{graph_convolution.2} parent=0 // pred_region
    _
  $region17: #{graph_convolution.2} parent=0 // pred_fallthru
    _

// kernel: graph_convolution.3
$region0: #{graph_convolution.3}
  #allocation0 [shape = 'u32[]', space=smem, size = 0x4, offset = 0x4, fixed_abs, tag = 'smem constant byte address 0x4 - core index']
  #allocation1 [shape = 'u32[144,128]{1,0:T(1,128)}', space=vmem, size = 0x12000, scoped, tag = 'internal scratch']
  #allocation2 [shape = 'f32[128,128]{1,0:T(8,128)}', space=vmem, size = 0x10000, scoped, tag = 'scratch operand']
  %s0 = inlined_call_operand.vmem [shape: f32[128,128], index: 0, kind: input, shape index: {}]
  %s1 = inlined_call_operand.vmem [shape: f32[128,128], index: 1, kind: input, shape index: {}]
  %s2 = inlined_call_operand.vmem [shape: f32[1,128], index: 2, kind: input, shape index: {}]
  %s3 = inlined_call_operand.vmem [shape: f32[128,128], index: 3, kind: output, shape index: {}]
  %s4 = sld [smem:[#allocation0]]
  $region30: #{graph_convolution.3} parent=0
    _
  %s6 = ssub.s32 1, %s4
  %s7 = scalar_select 0, %s6, %s4
  // Predicated region
  $region2: #{graph_convolution.3} parent=0 // pred_check
    _
  $region3: #{graph_convolution.3} parent=0 // pred_check_branch
    %9 = sbr.rel (0) target = $region5
  $region4: #{graph_convolution.3} parent=0 // pred_region
    _
  $region5: #{graph_convolution.3} parent=0 // pred_fallthru
    _
  // Predicated region
  $region6: #{graph_convolution.3} parent=0 // pred_check
    _
  $region7: #{graph_convolution.3} parent=0 // pred_check_branch
    %11 = sbr.rel (0) target = $region9
  $region8: #{graph_convolution.3} parent=0 // pred_region
    _
  $region9: #{graph_convolution.3} parent=0 // pred_fallthru
    _
  // Predicated region
  $region10: #{graph_convolution.3} parent=0 // pred_check
    _
  $region11: #{graph_convolution.3} parent=0 // pred_check_branch
    %13 = sbr.rel (0) target = $region13
  $region12: #{graph_convolution.3} parent=0 // pred_region
    _
  $region13: #{graph_convolution.3} parent=0 // pred_fallthru
    _
  %p14 = scmp.eq.s32.totalorder 0, 0
  // Predicated region
  $region14: #{graph_convolution.3} parent=0 // pred_check
    %p15 = pneg %p14
  $region15: #{graph_convolution.3} parent=0 // pred_check_branch
    %17 = sbr.rel (%p15) target = $region17
  $region16: #{graph_convolution.3} parent=0 // pred_region
    %18 = vst [vmem:[#allocation2] sm:$0xff] 0.0
    %19 = vst [vmem:[#allocation2 + $0x8] sm:$0xff] 0.0
    %20 = vst [vmem:[#allocation2 + $0x10] sm:$0xff] 0.0
    %21 = vst [vmem:[#allocation2 + $0x18] sm:$0xff] 0.0
    %22 = vst [vmem:[#allocation2 + $0x20] sm:$0xff] 0.0
    %23 = vst [vmem:[#allocation2 + $0x28] sm:$0xff] 0.0
    %24 = vst [vmem:[#allocation2 + $0x30] sm:$0xff] 0.0
    %25 = vst [vmem:[#allocation2 + $0x38] sm:$0xff] 0.0
    %26 = vst [vmem:[#allocation2 + $0x40] sm:$0xff] 0.0
    %27 = vst [vmem:[#allocation2 + $0x48] sm:$0xff] 0.0
    %28 = vst [vmem:[#allocation2 + $0x50] sm:$0xff] 0.0
    %29 = vst [vmem:[#allocation2 + $0x58] sm:$0xff] 0.0
    %30 = vst [vmem:[#allocation2 + $0x60] sm:$0xff] 0.0
    %31 = vst [vmem:[#allocation2 + $0x68] sm:$0xff] 0.0
    %32 = vst [vmem:[#allocation2 + $0x70] sm:$0xff] 0.0
    %33 = vst [vmem:[#allocation2 + $0x78] sm:$0xff] 0.0
  $region17: #{graph_convolution.3} parent=0 // pred_fallthru
    _
  %v34 = vld [vmem:[#allocation2] sm:$0xff]
  %v35 = vld [vmem:[#allocation2 + $0x8] sm:$0xff]
  %v36 = vld [vmem:[#allocation2 + $0x10] sm:$0xff]
  %v37 = vld [vmem:[#allocation2 + $0x18] sm:$0xff]
  %v38 = vld [vmem:[#allocation2 + $0x20] sm:$0xff]
  %v39 = vld [vmem:[#allocation2 + $0x28] sm:$0xff]
  %v40 = vld [vmem:[#allocation2 + $0x30] sm:$0xff]
  %v41 = vld [vmem:[#allocation2 + $0x38] sm:$0xff]
  %v42 = vld [vmem:[#allocation2 + $0x40] sm:$0xff]
  %v43 = vld [vmem:[#allocation2 + $0x48] sm:$0xff]
  %v44 = vld [vmem:[#allocation2 + $0x50] sm:$0xff]
  %v45 = vld [vmem:[#allocation2 + $0x58] sm:$0xff]
  %v46 = vld [vmem:[#allocation2 + $0x60] sm:$0xff]
  %v47 = vld [vmem:[#allocation2 + $0x68] sm:$0xff]
  %v48 = vld [vmem:[#allocation2 + $0x70] sm:$0xff]
  %v49 = vld [vmem:[#allocation2 + $0x78] sm:$0xff]
  %v50 = vld [vmem:[%s0] sm:$0xff]
  %v51 = vld [vmem:[%s0 + $0x8] sm:$0xff]
  %v52 = vld [vmem:[%s0 + $0x10] sm:$0xff]
  %v53 = vld [vmem:[%s0 + $0x18] sm:$0xff]
  %v54 = vld [vmem:[%s0 + $0x20] sm:$0xff]
  %v55 = vld [vmem:[%s0 + $0x28] sm:$0xff]
  %v56 = vld [vmem:[%s0 + $0x30] sm:$0xff]
  %v57 = vld [vmem:[%s0 + $0x38] sm:$0xff]
  %v58 = vld [vmem:[%s0 + $0x40] sm:$0xff]
  %v59 = vld [vmem:[%s0 + $0x48] sm:$0xff]
  %v60 = vld [vmem:[%s0 + $0x50] sm:$0xff]
  %v61 = vld [vmem:[%s0 + $0x58] sm:$0xff]
  %v62 = vld [vmem:[%s0 + $0x60] sm:$0xff]
  %v63 = vld [vmem:[%s0 + $0x68] sm:$0xff]
  %v64 = vld [vmem:[%s0 + $0x70] sm:$0xff]
  %v65 = vld [vmem:[%s0 + $0x78] sm:$0xff]
  %v66 = vld [vmem:[%s1] sm:$0xff]
  %v67 = vld [vmem:[%s1 + $0x8] sm:$0xff]
  %v68 = vld [vmem:[%s1 + $0x10] sm:$0xff]
  %v69 = vld [vmem:[%s1 + $0x18] sm:$0xff]
  %v70 = vld [vmem:[%s1 + $0x20] sm:$0xff]
  %v71 = vld [vmem:[%s1 + $0x28] sm:$0xff]
  %v72 = vld [vmem:[%s1 + $0x30] sm:$0xff]
  %v73 = vld [vmem:[%s1 + $0x38] sm:$0xff]
  %v74 = vld [vmem:[%s1 + $0x40] sm:$0xff]
  %v75 = vld [vmem:[%s1 + $0x48] sm:$0xff]
  %v76 = vld [vmem:[%s1 + $0x50] sm:$0xff]
  %v77 = vld [vmem:[%s1 + $0x58] sm:$0xff]
  %v78 = vld [vmem:[%s1 + $0x60] sm:$0xff]
  %v79 = vld [vmem:[%s1 + $0x68] sm:$0xff]
  %v80 = vld [vmem:[%s1 + $0x70] sm:$0xff]
  %v81 = vld [vmem:[%s1 + $0x78] sm:$0xff]
  %82 = vmatprep.subr.mxu0 0.0
  %83 = vmatpush1.msra.mxu0 %v66
  %84 = vmatprep.subr.mxu0 0.0
  %85 = vmatpush1.msra.mxu0 %v67
  %86 = vmatprep.subr.mxu0 0.0
  %87 = vmatpush1.msra.mxu0 %v68
  %88 = vmatprep.subr.mxu0 0.0
  %89 = vmatpush1.msra.mxu0 %v69
  %90 = vmatprep.subr.mxu0 0.0
  %91 = vmatpush1.msra.mxu0 %v70
  %92 = vmatprep.subr.mxu0 0.0
  %93 = vmatpush1.msra.mxu0 %v71
  %94 = vmatprep.subr.mxu0 0.0
  %95 = vmatpush1.msra.mxu0 %v72
  %96 = vmatprep.subr.mxu0 0.0
  %97 = vmatpush1.msra.mxu0 %v73
  %98 = vmatprep.subr.mxu0 0.0
  %99 = vmatpush1.msra.mxu0 %v74
  %100 = vmatprep.subr.mxu0 0.0
  %101 = vmatpush1.msra.mxu0 %v75
  %102 = vmatprep.subr.mxu0 0.0
  %103 = vmatpush1.msra.mxu0 %v76
  %104 = vmatprep.subr.mxu0 0.0
  %105 = vmatpush1.msra.mxu0 %v77
  %106 = vmatprep.subr.mxu0 0.0
  %107 = vmatpush1.msra.mxu0 %v78
  %108 = vmatprep.subr.mxu0 0.0
  %109 = vmatpush1.msra.mxu0 %v79
  %110 = vmatprep.subr.mxu0 0.0
  %111 = vmatpush1.msra.mxu0 %v80
  %112 = vmatprep.subr.mxu0 0.0
  %113 = vmatpush1.msra.mxu0 %v81
  %114 = vmatprep.subr.mxu0 0.0
  %115 = vmatpush1.msra.mxu0 0.0
  %116 = vmatprep.subr.mxu0 0.0
  %117 = vmatpush1.msra.mxu0 0.0
  %118 = vmatprep.subr.mxu0 0.0
  %119 = vmatpush1.msra.mxu0 0.0
  %120 = vmatprep.subr.mxu0 0.0
  %121 = vmatpush1.msra.mxu0 0.0
  %122 = vmatprep.subr.mxu0 0.0
  %123 = vmatpush1.msra.mxu0 0.0
  %124 = vmatprep.subr.mxu0 0.0
  %125 = vmatpush1.msra.mxu0 0.0
  %126 = vmatprep.subr.mxu0 0.0
  %127 = vmatpush1.msra.mxu0 0.0
  %128 = vmatprep.subr.mxu0 0.0
  %129 = vmatpush1.msra.mxu0 0.0
  %130 = vmatprep.subr.mxu0 0.0
  %131 = vmatpush1.msra.mxu0 0.0
  %132 = vmatprep.subr.mxu0 0.0
  %133 = vmatpush1.msra.mxu0 0.0
  %134 = vmatprep.subr.mxu0 0.0
  %135 = vmatpush1.msra.mxu0 0.0
  %136 = vmatprep.subr.mxu0 0.0
  %137 = vmatpush1.msra.mxu0 0.0
  %138 = vmatprep.subr.mxu0 0.0
  %139 = vmatpush1.msra.mxu0 0.0
  %140 = vmatprep.subr.mxu0 0.0
  %141 = vmatpush1.msra.mxu0 0.0
  %142 = vmatprep.subr.mxu0 0.0
  %143 = vmatpush1.msra.mxu0 0.0
  %144 = vmatprep.subr.mxu0 0.0
  %145 = vmatpush1.msra.mxu0 0.0
  %146 = vmatprep.mubr.f32.mxu0 0.0
  %147 = vmatmul.mubr.f32.gmra.mrb[0].mxu0 %v50
  %v148 = vpop.f32.mrb[0].mxu0
  %v149 = vadd.f32 0.0, %v148
  %v150 = vpop.f32.mrb[0].mxu0
  %151 = vmatprep.mubr.f32.mxu0 0.0
  %152 = vmatmul.mubr.f32.gmra.mrb[0].mxu0 %v51
  %v153 = vpop.f32.mrb[0].mxu0
  %v154 = vadd.f32 0.0, %v153
  %v155 = vpop.f32.mrb[0].mxu0
  %156 = vmatprep.mubr.f32.mxu0 0.0
  %157 = vmatmul.mubr.f32.gmra.mrb[0].mxu0 %v52
  %v158 = vpop.f32.mrb[0].mxu0
  %v159 = vadd.f32 0.0, %v158
  %v160 = vpop.f32.mrb[0].mxu0
  %161 = vmatprep.mubr.f32.mxu0 0.0
  %162 = vmatmul.mubr.f32.gmra.mrb[0].mxu0 %v53
  %v163 = vpop.f32.mrb[0].mxu0
  %v164 = vadd.f32 0.0, %v163
  %v165 = vpop.f32.mrb[0].mxu0
  %166 = vmatprep.mubr.f32.mxu0 0.0
  %167 = vmatmul.mubr.f32.gmra.mrb[0].mxu0 %v54
  %v168 = vpop.f32.mrb[0].mxu0
  %v169 = vadd.f32 0.0, %v168
  %v170 = vpop.f32.mrb[0].mxu0
  %171 = vmatprep.mubr.f32.mxu0 0.0
  %172 = vmatmul.mubr.f32.gmra.mrb[0].mxu0 %v55
  %v173 = vpop.f32.mrb[0].mxu0
  %v174 = vadd.f32 0.0, %v173
  %v175 = vpop.f32.mrb[0].mxu0
  %176 = vmatprep.mubr.f32.mxu0 0.0
  %177 = vmatmul.mubr.f32.gmra.mrb[0].mxu0 %v56
  %v178 = vpop.f32.mrb[0].mxu0
  %v179 = vadd.f32 0.0, %v178
  %v180 = vpop.f32.mrb[0].mxu0
  %181 = vmatprep.mubr.f32.mxu0 0.0
  %182 = vmatmul.mubr.f32.gmra.mrb[0].mxu0 %v57
  %v183 = vpop.f32.mrb[0].mxu0
  %v184 = vadd.f32 0.0, %v183
  %v185 = vpop.f32.mrb[0].mxu0
  %186 = vmatprep.mubr.f32.mxu0 0.0
  %187 = vmatmul.mubr.f32.gmra.mrb[0].mxu0 %v58
  %v188 = vpop.f32.mrb[0].mxu0
  %v189 = vadd.f32 0.0, %v188
  %v190 = vpop.f32.mrb[0].mxu0
  %191 = vmatprep.mubr.f32.mxu0 0.0
  %192 = vmatmul.mubr.f32.gmra.mrb[0].mxu0 %v59
  %v193 = vpop.f32.mrb[0].mxu0
  %v194 = vadd.f32 0.0, %v193
  %v195 = vpop.f32.mrb[0].mxu0
  %196 = vmatprep.mubr.f32.mxu0 0.0
  %197 = vmatmul.mubr.f32.gmra.mrb[0].mxu0 %v60
  %v198 = vpop.f32.mrb[0].mxu0
  %v199 = vadd.f32 0.0, %v198
  %v200 = vpop.f32.mrb[0].mxu0
  %201 = vmatprep.mubr.f32.mxu0 0.0
  %202 = vmatmul.mubr.f32.gmra.mrb[0].mxu0 %v61
  %v203 = vpop.f32.mrb[0].mxu0
  %v204 = vadd.f32 0.0, %v203
  %v205 = vpop.f32.mrb[0].mxu0
  %206 = vmatprep.mubr.f32.mxu0 0.0
  %207 = vmatmul.mubr.f32.gmra.mrb[0].mxu0 %v62
  %v208 = vpop.f32.mrb[0].mxu0
  %v209 = vadd.f32 0.0, %v208
  %v210 = vpop.f32.mrb[0].mxu0
  %211 = vmatprep.mubr.f32.mxu0 0.0
  %212 = vmatmul.mubr.f32.gmra.mrb[0].mxu0 %v63
  %v213 = vpop.f32.mrb[0].mxu0
  %v214 = vadd.f32 0.0, %v213
  %v215 = vpop.f32.mrb[0].mxu0
  %216 = vmatprep.mubr.f32.mxu0 0.0
  %217 = vmatmul.mubr.f32.gmra.mrb[0].mxu0 %v64
  %v218 = vpop.f32.mrb[0].mxu0
  %v219 = vadd.f32 0.0, %v218
  %v220 = vpop.f32.mrb[0].mxu0
  %221 = vmatprep.mubr.f32.mxu0 0.0
  %222 = vmatmul.mubr.f32.gmra.mrb[0].mxu0 %v65
  %v223 = vpop.f32.mrb[0].mxu0
  %v224 = vadd.f32 0.0, %v223
  %v225 = vpop.f32.mrb[0].mxu0
  %226 = vdwg.mxu0
  %v227 = vadd.f32 %v34, %v149
  %v228 = vadd.f32 %v35, %v154
  %v229 = vadd.f32 %v36, %v159
  %v230 = vadd.f32 %v37, %v164
  %v231 = vadd.f32 %v38, %v169
  %v232 = vadd.f32 %v39, %v174
  %v233 = vadd.f32 %v40, %v179
  %v234 = vadd.f32 %v41, %v184
  %v235 = vadd.f32 %v42, %v189
  %v236 = vadd.f32 %v43, %v194
  %v237 = vadd.f32 %v44, %v199
  %v238 = vadd.f32 %v45, %v204
  %v239 = vadd.f32 %v46, %v209
  %v240 = vadd.f32 %v47, %v214
  %v241 = vadd.f32 %v48, %v219
  %v242 = vadd.f32 %v49, %v224
  %243 = vst [vmem:[#allocation2] sm:$0xff] %v227
  %244 = vst [vmem:[#allocation2 + $0x8] sm:$0xff] %v228
  %245 = vst [vmem:[#allocation2 + $0x10] sm:$0xff] %v229
  %246 = vst [vmem:[#allocation2 + $0x18] sm:$0xff] %v230
  %247 = vst [vmem:[#allocation2 + $0x20] sm:$0xff] %v231
  %248 = vst [vmem:[#allocation2 + $0x28] sm:$0xff] %v232
  %249 = vst [vmem:[#allocation2 + $0x30] sm:$0xff] %v233
  %250 = vst [vmem:[#allocation2 + $0x38] sm:$0xff] %v234
  %251 = vst [vmem:[#allocation2 + $0x40] sm:$0xff] %v235
  %252 = vst [vmem:[#allocation2 + $0x48] sm:$0xff] %v236
  %253 = vst [vmem:[#allocation2 + $0x50] sm:$0xff] %v237
  %254 = vst [vmem:[#allocation2 + $0x58] sm:$0xff] %v238
  %255 = vst [vmem:[#allocation2 + $0x60] sm:$0xff] %v239
  %256 = vst [vmem:[#allocation2 + $0x68] sm:$0xff] %v240
  %257 = vst [vmem:[#allocation2 + $0x70] sm:$0xff] %v241
  %258 = vst [vmem:[#allocation2 + $0x78] sm:$0xff] %v242
  // Predicated region
  $region18: #{graph_convolution.3} parent=0 // pred_check
    %p259 = pneg %p14
  $region19: #{graph_convolution.3} parent=0 // pred_check_branch
    %261 = sbr.rel (%p259) target = $region21
  $region20: #{graph_convolution.3} parent=0 // pred_region
    %v262 = vld [vmem:[#allocation2] sm:$0xff]
    %v263 = vld [vmem:[#allocation2 + $0x8] sm:$0xff]
    %v264 = vld [vmem:[#allocation2 + $0x10] sm:$0xff]
    %v265 = vld [vmem:[#allocation2 + $0x18] sm:$0xff]
    %v266 = vld [vmem:[#allocation2 + $0x20] sm:$0xff]
    %v267 = vld [vmem:[#allocation2 + $0x28] sm:$0xff]
    %v268 = vld [vmem:[#allocation2 + $0x30] sm:$0xff]
    %v269 = vld [vmem:[#allocation2 + $0x38] sm:$0xff]
    %v270 = vld [vmem:[#allocation2 + $0x40] sm:$0xff]
    %v271 = vld [vmem:[#allocation2 + $0x48] sm:$0xff]
    %v272 = vld [vmem:[#allocation2 + $0x50] sm:$0xff]
    %v273 = vld [vmem:[#allocation2 + $0x58] sm:$0xff]
    %v274 = vld [vmem:[#allocation2 + $0x60] sm:$0xff]
    %v275 = vld [vmem:[#allocation2 + $0x68] sm:$0xff]
    %v276 = vld [vmem:[#allocation2 + $0x70] sm:$0xff]
    %v277 = vld [vmem:[#allocation2 + $0x78] sm:$0xff]
    %v278 = vld [vmem:[%s2] sm:$0x1]
    %v280 = vlaneseq
    %v281 = vshrl.u32 %v280, 7
    %v282 = vsub.s32 0, %v281
    %v283 = vrot.slane %v278, %v282
    %v285 = vadd.f32 %v262, %v283
    %v286 = vadd.f32 %v263, %v283
    %v287 = vadd.f32 %v264, %v283
    %v288 = vadd.f32 %v265, %v283
    %v289 = vadd.f32 %v266, %v283
    %v290 = vadd.f32 %v267, %v283
    %v291 = vadd.f32 %v268, %v283
    %v292 = vadd.f32 %v269, %v283
    %v293 = vadd.f32 %v270, %v283
    %v294 = vadd.f32 %v271, %v283
    %v295 = vadd.f32 %v272, %v283
    %v296 = vadd.f32 %v273, %v283
    %v297 = vadd.f32 %v274, %v283
    %v298 = vadd.f32 %v275, %v283
    %v299 = vadd.f32 %v276, %v283
    %v300 = vadd.f32 %v277, %v283
    %301 = vst [vmem:[%s3] sm:$0xff] %v285
    %302 = vst [vmem:[%s3 + $0x8] sm:$0xff] %v286
    %303 = vst [vmem:[%s3 + $0x10] sm:$0xff] %v287
    %304 = vst [vmem:[%s3 + $0x18] sm:$0xff] %v288
    %305 = vst [vmem:[%s3 + $0x20] sm:$0xff] %v289
    %306 = vst [vmem:[%s3 + $0x28] sm:$0xff] %v290
    %307 = vst [vmem:[%s3 + $0x30] sm:$0xff] %v291
    %308 = vst [vmem:[%s3 + $0x38] sm:$0xff] %v292
    %309 = vst [vmem:[%s3 + $0x40] sm:$0xff] %v293
    %310 = vst [vmem:[%s3 + $0x48] sm:$0xff] %v294
    %311 = vst [vmem:[%s3 + $0x50] sm:$0xff] %v295
    %312 = vst [vmem:[%s3 + $0x58] sm:$0xff] %v296
    %313 = vst [vmem:[%s3 + $0x60] sm:$0xff] %v297
    %314 = vst [vmem:[%s3 + $0x68] sm:$0xff] %v298
    %315 = vst [vmem:[%s3 + $0x70] sm:$0xff] %v299
    %316 = vst [vmem:[%s3 + $0x78] sm:$0xff] %v300
  $region21: #{graph_convolution.3} parent=0 // pred_fallthru
    _
  // Predicated region
  $region22: #{graph_convolution.3} parent=0 // pred_check
    _
  $region23: #{graph_convolution.3} parent=0 // pred_check_branch
    %318 = sbr.rel (0) target = $region25
  $region24: #{graph_convolution.3} parent=0 // pred_region
    _
  $region25: #{graph_convolution.3} parent=0 // pred_fallthru
    _
  // Predicated region
  $region26: #{graph_convolution.3} parent=0 // pred_check
    _
  $region27: #{graph_convolution.3} parent=0 // pred_check_branch
    %320 = sbr.rel (0) target = $region29
  $region28: #{graph_convolution.3} parent=0 // pred_region
    _
  $region29: #{graph_convolution.3} parent=0 // pred_fallthru
    _

</llo_original>
